<compile_context>
chip_gen: v5e
topology: v5e:2x2
jax: 0.10.0
libtpu: 0.0.40
codegen_flags: <defaults>
</compile_context>

<pallas_src>
import functools

import jax
import jax.numpy as jnp
from jax import lax
from jax.experimental import pallas as pl
from jax.experimental.pallas import tpu as pltpu

_LANE = 128
_MAX_ROW_TILE = 1024
_UNROLL_ORDER_LIMIT = 16   # fully unroll the recurrence up to this order


def _round_up(a: int, b: int) -> int:
    return ((a + b - 1) // b) * b


def _sublane_align(dtype) -> int:
    # sub-32-bit dtypes pack along sublanes: bf16 -> 16 rows, int8/fp8 -> 32.
    return max(8, 32 // jnp.dtype(dtype).itemsize)


def _vmem_budget() -> tuple[int, int]:
    """(double-buffered working-set budget, vmem_limit_bytes) per generation."""
    cap = 64 << 20  # conservative fallback: safe on every generation (v7x = 64 MiB)
    try:
        info = pltpu.get_tpu_info()
        cap = int(getattr(info, "vmem_capacity_bytes", cap))
    except Exception:
        pass
    budget = min(max(cap // 2, 16 << 20), 48 << 20)   # v7x: 32 MiB, v5e/v6e: 48 MiB
    limit = min(cap, budget + (16 << 20))             # headroom for compiler scratch
    return budget, limit


def _legendre_kernel(x_ref, out_ref, *, max_order: int, row_chunk: int):
    """Shifted Legendre polynomials for one (TM, 128) slab of samples.

    x_ref:   (TM, 128)                 input points x in [0, 1]
    out_ref: (max_order+1, TM, 128)    slab k holds P_k(2x - 1)
    """
    tm = x_ref.shape[0]
    out_dtype = out_ref.dtype

    # Process the slab in row sub-chunks to bound vreg pressure (no spills
    # even at TM = 1024).
    for rs in range(0, tm, row_chunk):
        sl = pl.ds(rs, row_chunk)
        z = 2.0 * x_ref[sl, :].astype(jnp.float32) - 1.0   # shift [0,1] -> [-1,1]

        p_km1 = jnp.ones_like(z)    # P_0
        p_k = z                     # P_1
        out_ref[0, sl, :] = p_km1.astype(out_dtype)
        out_ref[1, sl, :] = p_k.astype(out_dtype)

        # (k+1) P_{k+1} = (2k+1) z P_k - k P_{k-1}
        if max_order <= _UNROLL_ORDER_LIMIT:
            # Constants folded at trace time -> no per-element divide.
            for k in range(1, max_order):
                a_k = (2.0 * k + 1.0) / (k + 1.0)
                b_k = float(k) / (k + 1.0)
                p_kp1 = a_k * z * p_k - b_k * p_km1
                out_ref[k + 1, sl, :] = p_kp1.astype(out_dtype)
                p_km1, p_k = p_k, p_kp1
        else:
            # Large order counts: bounded live ranges + compact code.
            def body(k, carry):
                pm1, pk = carry
                kf = k.astype(jnp.float32)
                a_k = (2.0 * kf + 1.0) / (kf + 1.0)     # scalar divide only
                b_k = kf / (kf + 1.0)
                pkp1 = a_k * z * pk - b_k * pm1
                out_ref[k + 1, sl, :] = pkp1.astype(out_dtype)
                return (pk, pkp1)

            lax.fori_loop(1, max_order, body, (p_km1, p_k), unroll=4)


def shifted_legendre_batch(x: jax.Array, max_order: int, *,
                           row_tile: int | None = None,
                           out_dtype=None,
                           order_major: bool = False) -> jax.Array:
    """Pallas equivalent of ShiftedLegendrePolynomialBatch(max_order).forward(x).

    Args:
        x: shape (N,) or (N, 1), values in [0, 1].
        max_order: maximum polynomial order (>= 1).
        row_tile: optional override of the per-step sublane tile.
        out_dtype: storage dtype of the result (default: x.dtype).  bfloat16
            halves HBM write bytes on this write-bound kernel.
        order_major: if True, return (max_order+1, N) in the kernel-native
            layout and skip the final transpose (preferred for fused consumers).

    Returns:
        (N, max_order+1) array [P_0^shifted(x), ..., P_max_order^shifted(x)]
        (or (max_order+1, N) if order_major=True).
    """
    if not isinstance(max_order, int) or max_order < 1:
        raise ValueError("max_order must be an integer >= 1.")
    if x.ndim == 2 and x.shape[1] == 1:
        x = x[:, 0]
    elif x.ndim != 1:
        raise ValueError("Input tensor x must be of shape (N,) or (N,1).")

    n = x.shape[0]
    in_dtype = x.dtype
    out_dtype = jnp.dtype(in_dtype if out_dtype is None else out_dtype)
    n_orders = max_order + 1

    in_isz = jnp.dtype(in_dtype).itemsize
    out_isz = out_dtype.itemsize
    align = max(_sublane_align(in_dtype), _sublane_align(out_dtype))

    budget, vmem_limit = _vmem_budget()

    # Sublane-dense tiling: rows of 128 lanes, TM rows per grid step.
    rows = max(1, pl.cdiv(n, _LANE))
    rows8 = _round_up(rows, align)

    # VMEM per row of 128 samples, double-buffered: input block + n_orders out.
    per_row = 2 * _LANE * (in_isz + n_orders * out_isz)
    tm_cap = max(align, min(_MAX_ROW_TILE, (budget // per_row) // align * align))

    if row_tile is not None:
        tm = max(align, (int(row_tile) // align) * align)
        tm = min(tm, _round_up(rows8, align))
    else:
        # Aim for >= min_steps grid steps (pipeline depth; v7x megacore needs >= 2).
        min_steps = max(1, min(8, rows8 // align))
        tm_target = min(tm_cap, max(align, _round_up(pl.cdiv(rows8, min_steps), align)))
        # Divisor-aware choice: minimize dead tail-padding rows, prefer big tiles.
        best = None
        floor = max(align, tm_target - 16 * align)
        for cand in range(tm_target, floor - 1, -align):
            waste = _round_up(rows8, cand) - rows8
            key = (waste, -cand)
            if best is None or key < best[0]:
                best = (key, cand)
            if waste == 0:
                break
        tm = best[1]

    rows_pad = _round_up(rows8, tm)
    n_pad = rows_pad * _LANE

    # vreg-pressure bound: recurrence runs on <= 64-row sub-chunks of the slab.
    row_chunk = next(c for c in (64, 32, 16, 8) if c >= align and tm % c == 0)

    x_flat = jnp.zeros((n_pad,), dtype=in_dtype).at[:n].set(x)
    x2d = x_flat.reshape(rows_pad, _LANE)

    grid = (rows_pad // tm,)
    kernel = functools.partial(_legendre_kernel, max_order=max_order,
                               row_chunk=row_chunk)

    cost = pl.CostEstimate(
        flops=int(n_pad * (2 + 3 * max_order)),
        transcendentals=0,
        bytes_accessed=int(n_pad * (in_isz + n_orders * out_isz)),
    )

    out3d = pl.pallas_call(
        kernel,
        out_shape=jax.ShapeDtypeStruct((n_orders, rows_pad, _LANE), out_dtype),
        grid_spec=pltpu.PrefetchScalarGridSpec(
            num_scalar_prefetch=0,
            grid=grid,
            in_specs=[pl.BlockSpec((tm, _LANE), lambda i: (i, 0))],
            out_specs=pl.BlockSpec((n_orders, tm, _LANE), lambda i: (0, i, 0)),
        ),
        compiler_params=pltpu.CompilerParams(
            dimension_semantics=("parallel",),
            vmem_limit_bytes=int(vmem_limit),
        ),
        cost_estimate=cost,
    )(x2d)

    out2d = out3d.reshape(n_orders, n_pad)[:, :n]
    if order_major:
        return out2d                      # kernel-native layout, zero extra HBM traffic
    # PyTorch convention (N, max_order+1): one layout change outside the kernel.
    return out2d.T


def _reference(x: jax.Array, max_order: int) -> jax.Array:
    """Pure-JAX reference mirroring the PyTorch module."""
    if x.ndim == 2 and x.shape[1] == 1:
        x = x[:, 0]
    z = 2.0 * x.astype(jnp.float32) - 1.0
    p_list = [jnp.ones_like(z), z]
    for k in range(1, max_order):
        p_kp1 = ((2.0 * k + 1.0) * z * p_list[-1] - k * p_list[-2]) / (k + 1.0)
        p_list.append(p_kp1)
    return jnp.stack(p_list, axis=1)


if __name__ == "__main__":
    key = jax.random.PRNGKey(0)
    k1, k2, k3, k4 = jax.random.split(key, 4)

    # Case 1: module-style (N, 1) input, N not a multiple of 128 (padding path).
    x1 = jax.random.uniform(k1, (200, 1), dtype=jnp.float32)
    o1 = jax.block_until_ready(shifted_legendre_batch(x1, 5))
    r1 = _reference(x1, 5)
    assert o1.shape == (200, 6), o1.shape
    assert jnp.allclose(o1, r1, atol=1e-5, rtol=1e-5), "mismatch (case 1)"

    # Case 2: forced small row tile -> multi-step pipelined grid.
    x2 = jax.random.uniform(k2, (2048,), dtype=jnp.float32)
    o2 = jax.block_until_ready(shifted_legendre_batch(x2, 8, row_tile=8))
    r2 = _reference(x2, 8)
    assert o2.shape == (2048, 9), o2.shape
    assert jnp.allclose(o2, r2, atol=1e-5, rtol=1e-5), "mismatch (case 2)"

    # Case 3: large max_order -> in-kernel fori_loop recurrence path.
    x3 = jax.random.uniform(k3, (1000,), dtype=jnp.float32)
    o3 = jax.block_until_ready(shifted_legendre_batch(x3, 24))
    r3 = _reference(x3, 24)
    assert o3.shape == (1000, 25), o3.shape
    assert jnp.allclose(o3, r3, atol=1e-4, rtol=1e-4), "mismatch (case 3)"

    # Case 4: bf16 storage (halves HBM write bytes) + order-major (no transpose).
    x4 = jax.random.uniform(k4, (512,), dtype=jnp.float32)
    o4 = jax.block_until_ready(
        shifted_legendre_batch(x4, 6, out_dtype=jnp.bfloat16, order_major=True))
    r4 = _reference(x4, 6).T
    assert o4.shape == (7, 512), o4.shape
    assert jnp.allclose(o4.astype(jnp.float32), r4, atol=2e-2, rtol=2e-2), "mismatch (case 4)"

    print("KERNEL_OK")
</pallas_src>

<mosaic_0001>
module attributes {stable_mosaic.version = 11 : i64} {
  func.func @_legendre_kernel(%arg0: i32, %arg1: memref<8x128xf32, #tpu.memory_space<vmem>>, %arg2: memref<6x8x128xf32, #tpu.memory_space<vmem>>) attributes {dimension_semantics = [#tpu.dimension_semantics<parallel>], iteration_bounds = array<i64: 1>, scalar_prefetch = 0 : i64, scratch_operands = 0 : i64, tpu.core_type = #tpu.core_type<tc>, window_params = [{transform_indices = @transform_0, window_bounds = array<i64: 8, 128>}, {transform_indices = @transform_1, window_bounds = array<i64: 6, 8, 128>}]} {
    %c0 = arith.constant 0 : index
    %c0_0 = arith.constant 0 : index
    %0 = vector.load %arg1[%c0, %c0_0] : memref<8x128xf32, #tpu.memory_space<vmem>>, vector<8x128xf32>
    %cst = arith.constant 2.000000e+00 : f32
    %1 = vector.broadcast %cst : f32 to vector<8x128xf32>
    %2 = arith.mulf %1, %0 : vector<8x128xf32>
    %cst_1 = arith.constant 1.000000e+00 : f32
    %3 = vector.broadcast %cst_1 : f32 to vector<8x128xf32>
    %4 = arith.subf %2, %3 : vector<8x128xf32>
    %cst_2 = arith.constant 1.000000e+00 : f32
    %5 = vector.broadcast %cst_2 : f32 to vector<8x128xf32>
    %c0_3 = arith.constant 0 : index
    %c0_4 = arith.constant 0 : index
    %c0_5 = arith.constant 0 : index
    %6 = vector.load %arg2[%c0_3, %c0_4, %c0_5] : memref<6x8x128xf32, #tpu.memory_space<vmem>>, vector<1x8x128xf32>
    %7 = vector.shape_cast %6 : vector<1x8x128xf32> to vector<8x128xf32>
    %8 = vector.shape_cast %5 : vector<8x128xf32> to vector<1x8x128xf32>
    tpu.vector_store %arg2[%c0_3, %c0_4, %c0_5], %8 {strides = array<i32>} : memref<6x8x128xf32, #tpu.memory_space<vmem>>, vector<1x8x128xf32>,
    %c1 = arith.constant 1 : index
    %c0_6 = arith.constant 0 : index
    %c0_7 = arith.constant 0 : index
    %9 = vector.load %arg2[%c1, %c0_6, %c0_7] : memref<6x8x128xf32, #tpu.memory_space<vmem>>, vector<1x8x128xf32>
    %10 = vector.shape_cast %9 : vector<1x8x128xf32> to vector<8x128xf32>
    %11 = vector.shape_cast %4 : vector<8x128xf32> to vector<1x8x128xf32>
    tpu.vector_store %arg2[%c1, %c0_6, %c0_7], %11 {strides = array<i32>} : memref<6x8x128xf32, #tpu.memory_space<vmem>>, vector<1x8x128xf32>,
    %cst_8 = arith.constant 1.500000e+00 : f32
    %12 = vector.broadcast %cst_8 : f32 to vector<8x128xf32>
    %13 = arith.mulf %12, %4 : vector<8x128xf32>
    %14 = arith.mulf %13, %4 : vector<8x128xf32>
    %cst_9 = arith.constant 5.000000e-01 : f32
    %15 = vector.broadcast %cst_9 : f32 to vector<8x128xf32>
    %16 = arith.mulf %15, %5 : vector<8x128xf32>
    %17 = arith.subf %14, %16 : vector<8x128xf32>
    %c2 = arith.constant 2 : index
    %c0_10 = arith.constant 0 : index
    %c0_11 = arith.constant 0 : index
    %18 = vector.load %arg2[%c2, %c0_10, %c0_11] : memref<6x8x128xf32, #tpu.memory_space<vmem>>, vector<1x8x128xf32>
    %19 = vector.shape_cast %18 : vector<1x8x128xf32> to vector<8x128xf32>
    %20 = vector.shape_cast %17 : vector<8x128xf32> to vector<1x8x128xf32>
    tpu.vector_store %arg2[%c2, %c0_10, %c0_11], %20 {strides = array<i32>} : memref<6x8x128xf32, #tpu.memory_space<vmem>>, vector<1x8x128xf32>,
    %cst_12 = arith.constant 1.66666663 : f32
    %21 = vector.broadcast %cst_12 : f32 to vector<8x128xf32>
    %22 = arith.mulf %21, %4 : vector<8x128xf32>
    %23 = arith.mulf %22, %17 : vector<8x128xf32>
    %cst_13 = arith.constant 0.666666686 : f32
    %24 = vector.broadcast %cst_13 : f32 to vector<8x128xf32>
    %25 = arith.mulf %24, %4 : vector<8x128xf32>
    %26 = arith.subf %23, %25 : vector<8x128xf32>
    %c3 = arith.constant 3 : index
    %c0_14 = arith.constant 0 : index
    %c0_15 = arith.constant 0 : index
    %27 = vector.load %arg2[%c3, %c0_14, %c0_15] : memref<6x8x128xf32, #tpu.memory_space<vmem>>, vector<1x8x128xf32>
    %28 = vector.shape_cast %27 : vector<1x8x128xf32> to vector<8x128xf32>
    %29 = vector.shape_cast %26 : vector<8x128xf32> to vector<1x8x128xf32>
    tpu.vector_store %arg2[%c3, %c0_14, %c0_15], %29 {strides = array<i32>} : memref<6x8x128xf32, #tpu.memory_space<vmem>>, vector<1x8x128xf32>,
    %cst_16 = arith.constant 1.750000e+00 : f32
    %30 = vector.broadcast %cst_16 : f32 to vector<8x128xf32>
    %31 = arith.mulf %30, %4 : vector<8x128xf32>
    %32 = arith.mulf %31, %26 : vector<8x128xf32>
    %cst_17 = arith.constant 7.500000e-01 : f32
    %33 = vector.broadcast %cst_17 : f32 to vector<8x128xf32>
    %34 = arith.mulf %33, %17 : vector<8x128xf32>
    %35 = arith.subf %32, %34 : vector<8x128xf32>
    %c4 = arith.constant 4 : index
    %c0_18 = arith.constant 0 : index
    %c0_19 = arith.constant 0 : index
    %36 = vector.load %arg2[%c4, %c0_18, %c0_19] : memref<6x8x128xf32, #tpu.memory_space<vmem>>, vector<1x8x128xf32>
    %37 = vector.shape_cast %36 : vector<1x8x128xf32> to vector<8x128xf32>
    %38 = vector.shape_cast %35 : vector<8x128xf32> to vector<1x8x128xf32>
    tpu.vector_store %arg2[%c4, %c0_18, %c0_19], %38 {strides = array<i32>} : memref<6x8x128xf32, #tpu.memory_space<vmem>>, vector<1x8x128xf32>,
    %cst_20 = arith.constant 1.800000e+00 : f32
    %39 = vector.broadcast %cst_20 : f32 to vector<8x128xf32>
    %40 = arith.mulf %39, %4 : vector<8x128xf32>
    %41 = arith.mulf %40, %35 : vector<8x128xf32>
    %cst_21 = arith.constant 8.000000e-01 : f32
    %42 = vector.broadcast %cst_21 : f32 to vector<8x128xf32>
    %43 = arith.mulf %42, %26 : vector<8x128xf32>
    %44 = arith.subf %41, %43 : vector<8x128xf32>
    %c5 = arith.constant 5 : index
    %c0_22 = arith.constant 0 : index
    %c0_23 = arith.constant 0 : index
    %45 = vector.load %arg2[%c5, %c0_22, %c0_23] : memref<6x8x128xf32, #tpu.memory_space<vmem>>, vector<1x8x128xf32>
    %46 = vector.shape_cast %45 : vector<1x8x128xf32> to vector<8x128xf32>
    %47 = vector.shape_cast %44 : vector<8x128xf32> to vector<1x8x128xf32>
    tpu.vector_store %arg2[%c5, %c0_22, %c0_23], %47 {strides = array<i32>} : memref<6x8x128xf32, #tpu.memory_space<vmem>>, vector<1x8x128xf32>,
    return
  }
  func.func @transform_0(%arg0: i32) -> (i32, i32) {
    %c0_i32 = arith.constant 0 : i32
    %c0_i32_0 = arith.constant 0 : i32
    return %arg0, %c0_i32 : i32, i32
  }
  func.func @transform_1(%arg0: i32) -> (i32, i32, i32) {
    %c0_i32 = arith.constant 0 : i32
    %c0_i32_0 = arith.constant 0 : i32
    %c0_i32_1 = arith.constant 0 : i32
    return %c0_i32, %arg0, %c0_i32_0 : i32, i32, i32
  }
}

</mosaic_0001>

<llo_original>
// kernel: tpu_custom_call.1
$region0: #{tpu_custom_call.1}
  #allocation0 [shape = 'u32[]', space=smem, size = 0x4, offset = 0x4, fixed_abs, tag = 'smem constant byte address 0x4 - core index']
  #allocation1 [shape = 'u32[72,128]{1,0:T(1,128)}', space=vmem, size = 0x9000, scoped, tag = 'internal scratch']
  %s0 = inlined_call_operand.hbm [shape: f32[8,128], index: 0, kind: input, shape index: {}]
  %s1 = inlined_call_operand.hbm [shape: f32[6,8,128], index: 1, kind: output, shape index: {}]
  %s2 = sld [smem:[#allocation0]]
  $region18: #{tpu_custom_call.1} parent=0
    _
  %s4 = ssub.s32 1, %s2
  %s5 = scalar_select 0, %s4, %s2
  $region1: #{tpu_custom_call.1} parent=0
    #allocation2 [shape = 'u8[4096]{0}', space=vmem, size = 0x1000, scoped, tag = 'input window, operand 0, single buffered']
    #allocation3 [shape = 's32[1]{0}', space=sflag, size = 0x4, scoped, tag = 'scoped memory for tpu_custom_call.1']
    #allocation4 [shape = 's32[1]{0}', space=sflag, size = 0x4, scoped, tag = 'scoped memory for tpu_custom_call.1']
    #allocation5 [shape = 'u8[24576]{0}', space=vmem, size = 0x6000, scoped, tag = 'output window, operand 0, single buffered']
    %6 = vsyncpa [#allocation3], 0
    %7 = vsyncpa [#allocation4], 0
    // Predicated region
    $region2: #{tpu_custom_call.1} parent=1 // pred_check
      _
    $region3: #{tpu_custom_call.1} parent=1 // pred_check_branch
      %9 = sbr.rel (0) target = $region5
    $region4: #{tpu_custom_call.1} parent=1 // pred_region
      %11 = vsyncadd [#allocation3], 0
      %s13 = sshll.u32 %s0, 4
      %s14 = int_to_ptr.hbm [resolvable:$true] %s13
      %s15 = sshll.u32 [#allocation2], 4
      %s16 = int_to_ptr.vmem [resolvable:$true] %s15
      %18 = dma.hbm_to_vmem [thread:$0]  %s14, 128, %s16, [#allocation3]
    $region5: #{tpu_custom_call.1} parent=1 // pred_fallthru
      _
    // Predicated region
    $region6: #{tpu_custom_call.1} parent=1 // pred_check
      _
    $region7: #{tpu_custom_call.1} parent=1 // pred_check_branch
      %20 = sbr.rel (0) target = $region9
    $region8: #{tpu_custom_call.1} parent=1 // pred_region
      %22 = dma.done [#allocation3], 128
    $region9: #{tpu_custom_call.1} parent=1 // pred_fallthru
      _
    %v23 = vld [vmem:[#allocation2] sm:$0xff]
    %v24 = vmul.f32 %v23, 2.0
    %v25 = vsub.f32 %v24, 1.0
    %26 = vst [vmem:[#allocation5] sm:$0xff] 1.0
    %s27 = scalar_lea.vmem [#allocation5], 8
    %28 = vst [vmem:[%s27] sm:$0xff] %v25
    %v29 = vmul.f32 %v25, 1.5
    %v30 = vmul.f32 %v29, %v25
    %v31 = vsub.f32 %v30, 0.5
    %s32 = scalar_lea.vmem [#allocation5], 16
    %33 = vst [vmem:[%s32] sm:$0xff] %v31
    %v34 = vmul.f32 %v25, 1.6666666
    %v35 = vmul.f32 %v34, %v31
    %v36 = vmul.f32 %v25, 0.6666667
    %v37 = vsub.f32 %v35, %v36
    %s38 = scalar_lea.vmem [#allocation5], 24
    %39 = vst [vmem:[%s38] sm:$0xff] %v37
    %v40 = vmul.f32 %v25, 1.75
    %v41 = vmul.f32 %v40, %v37
    %v42 = vmul.f32 %v31, 0.75
    %v43 = vsub.f32 %v41, %v42
    %s44 = scalar_lea.vmem [#allocation5], 32
    %45 = vst [vmem:[%s44] sm:$0xff] %v43
    %v46 = vmul.f32 %v25, 1.8
    %v47 = vmul.f32 %v46, %v43
    %v48 = vmul.f32 %v37, 0.8
    %v49 = vsub.f32 %v47, %v48
    %s50 = scalar_lea.vmem [#allocation5], 40
    %51 = vst [vmem:[%s50] sm:$0xff] %v49
    // Predicated region
    $region10: #{tpu_custom_call.1} parent=1 // pred_check
      _
    $region11: #{tpu_custom_call.1} parent=1 // pred_check_branch
      %53 = sbr.rel (0) target = $region13
    $region12: #{tpu_custom_call.1} parent=1 // pred_region
      %55 = vsyncadd [#allocation4], 0
      %s56 = sshll.u32 [#allocation5], 4
      %s57 = int_to_ptr.vmem [resolvable:$true] %s56
      %s58 = sshll.u32 %s1, 4
      %s59 = int_to_ptr.hbm [resolvable:$true] %s58
      %64 = dma.vmem_to_hbm [thread:$0]  %s57, 768, %s59, [#allocation4], 128, 128, 8
    $region13: #{tpu_custom_call.1} parent=1 // pred_fallthru
      _
    // Predicated region
    $region14: #{tpu_custom_call.1} parent=1 // pred_check
      _
    $region15: #{tpu_custom_call.1} parent=1 // pred_check_branch
      %66 = sbr.rel (0) target = $region17
    $region16: #{tpu_custom_call.1} parent=1 // pred_region
      %68 = dma.done [#allocation4], 768
    $region17: #{tpu_custom_call.1} parent=1 // pred_fallthru
      _
    %69 = vsyncpa [#allocation3], 1
    %70 = vsyncpa [#allocation4], 1

</llo_original>
